<compile_context>
chip_gen: v7x
topology: tpu7x:2x2x1
jax: 0.10.0
libtpu: 0.0.40
codegen_flags: <defaults>
</compile_context>

<pallas_src>
import functools
import math

import jax
import jax.numpy as jnp
from jax import lax
from jax.experimental import pallas as pl
from jax.experimental.pallas import tpu as pltpu


def _cdiv(a, b):
    return -(-a // b)


def _round_up(x, m):
    return _cdiv(x, m) * m


@functools.lru_cache(maxsize=None)
def _vmem_limit_bytes():
    """Generation-aware scoped-VMEM limit (~3/4 of physical per-core VMEM)."""
    phys = 64 * 1024 * 1024  # conservative default (v7x per-TC physical)
    try:
        info = pltpu.get_tpu_info()
        cap = getattr(info, "vmem_capacity_bytes", None)
        if cap:
            phys = int(cap)
    except Exception:
        pass
    return min((phys * 3) // 4, 112 * 1024 * 1024)


@functools.lru_cache(maxsize=None)
def _eup_has_bf16():
    """True on v6e / v7x (bf16 EUP); False on v2-v5 where bf16 elementwise upconverts."""
    try:
        kind = jax.devices()[0].device_kind.lower()
    except Exception:
        return False
    return not any(tag in kind for tag in ("v2", "v3", "v4", "v5"))


# ----------------------------------------------------------------------------
# Kernel 1: fused add + LayerNorm (and a no-residual variant)
# ----------------------------------------------------------------------------
def _add_layernorm_kernel(x_ref, r_ref, w_ref, b_ref, y_ref, res_ref, *, eps):
    s = x_ref[...].astype(jnp.float32) + r_ref[...].astype(jnp.float32)
    res_ref[...] = s.astype(res_ref.dtype)          # residual_in_fp32
    mean = jnp.mean(s, axis=-1, keepdims=True)
    c = s - mean
    var = jnp.mean(c * c, axis=-1, keepdims=True)
    normed = c * lax.rsqrt(var + eps)
    y_ref[...] = (normed * w_ref[...] + b_ref[...]).astype(y_ref.dtype)


def _layernorm_kernel(x_ref, w_ref, b_ref, y_ref, res_ref, *, eps):
    # residual is None: residual := hidden_states (no zeros tensor streamed).
    s = x_ref[...].astype(jnp.float32)
    res_ref[...] = s.astype(res_ref.dtype)
    mean = jnp.mean(s, axis=-1, keepdims=True)
    c = s - mean
    var = jnp.mean(c * c, axis=-1, keepdims=True)
    normed = c * lax.rsqrt(var + eps)
    y_ref[...] = (normed * w_ref[...] + b_ref[...]).astype(y_ref.dtype)


def _pick_block_rows(M, D, budget_bytes):
    # ~4 (rows, D) f32-equivalent streams, double-buffered.  Bigger tiles ->
    # closer to the HBM roofline (measured ~29% at 128 rows vs ~85% at 512).
    per_row = D * 4 * 4 * 2
    rows = max(8, min(2048, budget_bytes // max(per_row, 1)))
    rows = (rows // 8) * 8
    return M if M <= rows else rows


def add_layernorm(x, resid, weight, bias, *, eps=1e-5, out_dtype=jnp.bfloat16):
    B, L, D = x.shape
    M = B * L
    x2 = x.reshape(M, D)
    w2 = weight.reshape(1, D).astype(jnp.float32)
    b2 = bias.reshape(1, D).astype(jnp.float32)

    vmem_limit = _vmem_limit_bytes()
    rows = _pick_block_rows(M, D, int(vmem_limit * 0.8))
    row_spec = pl.BlockSpec((rows, D), lambda i: (i, 0))
    vec_spec = pl.BlockSpec((1, D), lambda i: (0, 0))
    out_shapes = (jax.ShapeDtypeStruct((M, D), out_dtype),
                  jax.ShapeDtypeStruct((M, D), jnp.float32))
    cp = pltpu.CompilerParams(dimension_semantics=("parallel",),
                              vmem_limit_bytes=vmem_limit)

    if resid is None:
        normed, res_out = pl.pallas_call(
            functools.partial(_layernorm_kernel, eps=eps),
            out_shape=out_shapes,
            grid=(pl.cdiv(M, rows),),
            in_specs=[row_spec, vec_spec, vec_spec],
            out_specs=(row_spec, row_spec),
            compiler_params=cp,
        )(x2, w2, b2)
    else:
        r2 = resid.reshape(M, D)
        normed, res_out = pl.pallas_call(
            functools.partial(_add_layernorm_kernel, eps=eps),
            out_shape=out_shapes,
            grid=(pl.cdiv(M, rows),),
            in_specs=[row_spec, row_spec, vec_spec, vec_spec],
            out_specs=(row_spec, row_spec),
            compiler_params=cp,
        )(x2, r2, w2, b2)
    return normed.reshape(B, L, D), res_out.reshape(B, L, D)


# ----------------------------------------------------------------------------
# Kernel 2: Mamba mixer (grid = (batch, sequence-chunk))
# ----------------------------------------------------------------------------
def _mamba_kernel(h_ref, inwx_ref, inwz_ref, convw_ref, convb_ref, xpw_ref,
                  dtw_ref, dtb_ref, alogT_ref, dskip_ref, outw_ref, o_ref,
                  xpad_s, dt_s, xc_s, z_s, b_s, c_s, y_s, hstate_s, xtail_s,
                  *, d_state, dt_rank, d_conv, chunk, t_lane, bf16_exp):
    Lc = dt_s.shape[0]
    d_inner = dt_s.shape[1]

    # Reset the sequence carries (scan state + conv tail) at the start of each
    # batch element's sequence (the L-chunk grid axis is "arbitrary").
    @pl.when(pl.program_id(1) == 0)
    def _():
        hstate_s[...] = jnp.zeros_like(hstate_s)
        xtail_s[...] = jnp.zeros_like(xtail_s)

    # ---- in_proj (bias=False), split into x / z halves (no (L, 2*d_inner) temp) ----
    h = h_ref[0]                                                   # (Lc, D) bf16
    x = jnp.dot(h, inwx_ref[...], preferred_element_type=jnp.float32)   # (Lc, d_inner) f32
    z = jnp.dot(h, inwz_ref[...], preferred_element_type=jnp.float32)
    z_s[...] = z.astype(z_s.dtype)                                 # bf16: only feeds SiLU gate

    # ---- causal depthwise conv1d along L (+ bias) then SiLU ----
    # 8-row (sublane-aligned) left pad: the bulk (Lc, d_inner) store is unmasked;
    # the last 8 rows are carried to the next L-chunk.
    xpad_s[0:8, :] = xtail_s[...]
    xpad_s[8:8 + Lc, :] = x
    xtail_s[...] = xpad_s[Lc:Lc + 8, :]
    acc = convb_ref[...]
    for k in range(d_conv):
        off = 8 - (d_conv - 1) + k
        acc = acc + xpad_s[off:off + Lc, :] * convw_ref[k:k + 1, :]
    xconv = acc * jax.nn.sigmoid(acc)                              # SiLU, f32
    xc_bf = xconv.astype(jnp.bfloat16)
    xc_s[...] = xc_bf

    # ---- x_proj (no bias): bf16 MXU matmul -> (dt, B, C) ----
    xdbl = jnp.dot(xc_bf, xpw_ref[...], preferred_element_type=jnp.float32)
    dt_in = xdbl[:, :dt_rank]
    b_s[...] = xdbl[:, dt_rank:dt_rank + d_state]
    c_s[...] = xdbl[:, dt_rank + d_state:dt_rank + 2 * d_state]

    # ---- dt_proj (bf16 MXU) + stable softplus (f32) ----
    dt_pre = jnp.dot(dt_in.astype(jnp.bfloat16), dtw_ref[...],
                     preferred_element_type=jnp.float32) + dtb_ref[...]
    dt_s[...] = jnp.maximum(dt_pre, 0.0) + jnp.log(1.0 + jnp.exp(-jnp.abs(dt_pre)))

    # ---- selective scan: d_inner lane tiles (outer) x time chunks (inner) ----
    # The (d_state, t_lane) state tile stays in vregs for the whole time loop;
    # dA / dBx are produced batched per chunk (EUP/VPU), and the chunk readout
    # is one batched multiply + sublane reduce + one aligned store.
    n_t = Lc // chunk
    n_lane = d_inner // t_lane
    for lt in range(n_lane):
        lane = pl.ds(lt * t_lane, t_lane)                          # static slice
        A_tile = -jnp.exp(alogT_ref[:, lane])                      # (d_state, t_lane) f32

        def tbody(c, hstate):
            t0 = pl.multiple_of(c * chunk, chunk)
            rows = pl.ds(t0, chunk)
            dt_c = dt_s[rows, lane]                                # (chunk, t_lane) f32
            x_c = xc_s[rows, lane].astype(jnp.float32)
            B_c = b_s[rows, :]                                     # (chunk, d_state)
            C_c = c_s[rows, :]
            ddtA = dt_c[:, None, :] * A_tile[None, :, :]           # (chunk, d_state, t_lane)
            if bf16_exp:
                # bf16 EUP (v6e/v7x): ~2x exp throughput and half the dA slab.
                dA = jnp.exp(ddtA.astype(jnp.bfloat16))
            else:
                dA = jnp.exp(ddtA)
            dBx = (dt_c * x_c)[:, None, :] * B_c[:, :, None]       # (chunk, d_state, t_lane)
            hs = []
            for i in range(chunk):                                 # small static unroll
                hstate = dA[i] * hstate + dBx[i]
                hs.append(hstate)
            hall = jnp.stack(hs, axis=0)                           # (chunk, d_state, t_lane)
            # y[t, :] = sum_s h[t, s, :] * C[t, s]  (batched sublane reduce)
            y_s[rows, lane] = jnp.sum(hall * C_c[:, :, None], axis=1)
            return hstate

        hstate_s[:, lane] = lax.fori_loop(0, n_t, tbody, hstate_s[:, lane])

    # ---- skip connection, SiLU(z) gate, out_proj ----
    y = y_s[...] + dskip_ref[...] * xc_s[...].astype(jnp.float32)
    zf = z_s[...].astype(jnp.float32)
    y = y * (zf * jax.nn.sigmoid(zf))
    out = jnp.dot(y.astype(jnp.bfloat16), outw_ref[...],
                  preferred_element_type=jnp.float32)              # (Lc, D)
    o_ref[0] = out.astype(o_ref.dtype)


def mamba_mixer(p, hidden, *, out_dtype=jnp.bfloat16):
    B, L, D = hidden.shape
    d_inner = p['in_wx'].shape[1]
    d_state = p['A_logT'].shape[0]
    dt_rank = p['dt_w'].shape[0]
    d_conv = p['conv_w'].shape[0]

    # Sequence tiling: the mixer grid walks L in chunks of Lc rows ("arbitrary"),
    # carrying the scan state + conv tail, so the per-chunk scratch stays small
    # enough for v7x's 64 MiB VMEM.  L is zero-padded to a multiple of Lc (the
    # scan is causal, so trailing pad rows cannot pollute valid outputs).
    chunk = 16 if L >= 16 else 8
    n_seq = _cdiv(L, 512)
    Lc = _round_up(_cdiv(L, n_seq), chunk)
    L_pad = Lc * n_seq

    # d_inner lane-tile for the scan (hstate tile stays resident in vregs).
    t_lane = d_inner
    for c in (512, 256, 128, 64):
        if d_inner % c == 0:
            t_lane = c
            break

    hidden = hidden.astype(jnp.bfloat16)
    if L_pad != L:
        hidden = jnp.pad(hidden, ((0, 0), (0, L_pad - L), (0, 0)))

    kernel = functools.partial(_mamba_kernel, d_state=d_state, dt_rank=dt_rank,
                               d_conv=d_conv, chunk=chunk, t_lane=t_lane,
                               bf16_exp=_eup_has_bf16())

    def full(a):
        n = a.ndim
        return pl.BlockSpec(a.shape, lambda b, l, _n=n: (0,) * _n)

    # TODO(synk): single-buffer the grid-invariant weight specs
    # (pipeline_mode=pl.Buffered(1)) to recover VMEM on v7x once that is
    # reliably supported for pallas_call BlockSpecs.
    # TODO(synk): for B=1 decode on v7x, add a second parallel work split
    # (e.g. over d_inner halves) so both TensorCores are used.
    scratch = [
        pltpu.VMEM((Lc + 8, d_inner), jnp.float32),   # aligned padded conv input
        pltpu.VMEM((Lc, d_inner), jnp.float32),       # dt (post-softplus)
        pltpu.VMEM((Lc, d_inner), jnp.bfloat16),      # x (post conv+SiLU), bf16
        pltpu.VMEM((Lc, d_inner), jnp.bfloat16),      # z (gate input), bf16
        pltpu.VMEM((Lc, d_state), jnp.float32),       # B
        pltpu.VMEM((Lc, d_state), jnp.float32),       # C
        pltpu.VMEM((Lc, d_inner), jnp.float32),       # y (scan output)
        pltpu.VMEM((d_state, d_inner), jnp.float32),  # scan state carry
        pltpu.VMEM((8, d_inner), jnp.float32),        # conv tail carry
    ]

    out = pl.pallas_call(
        kernel,
        out_shape=jax.ShapeDtypeStruct((B, L_pad, D), out_dtype),
        grid=(B, n_seq),
        in_specs=[pl.BlockSpec((1, Lc, D), lambda b, l: (b, l, 0)),
                  full(p['in_wx']), full(p['in_wz']),
                  full(p['conv_w']), full(p['conv_b']),
                  full(p['xproj_w']), full(p['dt_w']), full(p['dt_b']),
                  full(p['A_logT']), full(p['D']), full(p['out_w'])],
        out_specs=pl.BlockSpec((1, Lc, D), lambda b, l: (b, l, 0)),
        scratch_shapes=scratch,
        compiler_params=pltpu.CompilerParams(
            dimension_semantics=("parallel", "arbitrary"),  # batch parallel, L-chunks sequential
            vmem_limit_bytes=_vmem_limit_bytes()),
    )(hidden, p['in_wx'], p['in_wz'], p['conv_w'], p['conv_b'], p['xproj_w'],
      p['dt_w'], p['dt_b'], p['A_logT'], p['D'], p['out_w'])

    if L_pad != L:
        out = out[:, :L, :]
    return out


# ----------------------------------------------------------------------------
# Block forward: Add -> LayerNorm -> Mixer, returns (hidden_states, residual)
# ----------------------------------------------------------------------------
def block_forward(params, hidden_states, residual=None, *, eps=1e-5):
    # drop_path = 0.0 -> Identity; residual_in_fp32 -> fp32 residual out.
    normed, new_residual = add_layernorm(hidden_states, residual,
                                         params['norm_w'], params['norm_b'],
                                         eps=eps, out_dtype=jnp.bfloat16)
    # Mixer output emitted in bf16: the fp32 residual carries precision and the
    # next block's LN re-promotes to f32 anyway (halves inter-kernel HBM traffic).
    hidden_out = mamba_mixer(params, normed, out_dtype=jnp.bfloat16)
    # TODO(synk): allocate_inference_cache / inference_params (decode-time cache) not modeled.
    return hidden_out, new_residual


# ----------------------------------------------------------------------------
# Parameter init (shapes from Mamba(d_model, d_state=16, d_conv=4, expand=2))
# ----------------------------------------------------------------------------
def init_params(key, d_model, d_state=16, d_conv=4, expand=2):
    d_inner = expand * d_model
    dt_rank = math.ceil(d_model / 16)
    ks = jax.random.split(key, 7)

    def rand(k, shape, scale):
        return jax.random.normal(k, shape, jnp.float32) * scale

    p = {}
    p['norm_w'] = jnp.ones((d_model,), jnp.float32)
    p['norm_b'] = jnp.zeros((d_model,), jnp.float32)
    p['in_w'] = rand(ks[0], (d_model, 2 * d_inner), 0.1)            # in_proj (bias=False)
    p['conv_w'] = rand(ks[1], (d_conv, d_inner), 0.2)               # depthwise conv, time-major
    p['conv_b'] = rand(ks[2], (1, d_inner), 0.05)
    p['xproj_w'] = rand(ks[3], (d_inner, dt_rank + 2 * d_state), 0.1)   # x_proj (bias=False)
    p['dt_w'] = rand(ks[4], (dt_rank, d_inner), 0.5)                # dt_proj weight (transposed)
    p['dt_b'] = rand(ks[5], (1, d_inner), 0.1)                      # dt_proj bias
    A = jnp.tile(jnp.arange(1, d_state + 1, dtype=jnp.float32)[None, :], (d_inner, 1))
    p['A_log'] = jnp.log(A)                                         # S4D-real init
    p['D'] = jnp.ones((d_inner, 1), jnp.float32)
    p['out_w'] = rand(ks[6], (d_inner, d_model), 0.1)               # out_proj (bias=False)
    return p


def prepare_params(p):
    """Kernel-ready layout: in_proj split into x/z halves, bf16 projection
    weights (MXU-native, half the HBM/VMEM), A_log transposed so d_inner is
    lane-dense in the scan, D/conv_b/dt_b as (1, d_inner)."""
    q = dict(p)
    d_inner = p['in_w'].shape[1] // 2
    q['in_wx'] = p['in_w'][:, :d_inner].astype(jnp.bfloat16)
    q['in_wz'] = p['in_w'][:, d_inner:].astype(jnp.bfloat16)
    del q['in_w']
    q['xproj_w'] = p['xproj_w'].astype(jnp.bfloat16)
    q['out_w'] = p['out_w'].astype(jnp.bfloat16)
    q['dt_w'] = p['dt_w'].astype(jnp.bfloat16)
    q['A_logT'] = jnp.transpose(p['A_log'])                         # (d_state, d_inner)
    q['D'] = p['D'].reshape(1, -1)                                  # (1, d_inner)
    del q['A_log']
    return q


if __name__ == "__main__":
    key = jax.random.PRNGKey(0)
    B, L, D = 2, 8, 32
    kx, kp = jax.random.split(key, 2)
    x = jax.random.normal(kx, (B, L, D), jnp.float32)
    params = prepare_params(init_params(kp, D))

    # First block in the stack: residual is None.
    h1, r1 = block_forward(params, x, None)
    # A subsequent block: residual provided.
    h2, r2 = block_forward(params, h1, r1)

    jax.block_until_ready((h1, r1, h2, r2))
    assert h1.shape == (B, L, D) and r1.dtype == jnp.float32
    assert h2.shape == (B, L, D) and r2.shape == (B, L, D)
    print("KERNEL_OK")
</pallas_src>

<mosaic_0001>
module attributes {stable_mosaic.version = 11 : i64} {
  func.func @_layernorm_kernel(%arg0: i32, %arg1: memref<16x32xf32, #tpu.memory_space<vmem>>, %arg2: memref<1x32xf32, #tpu.memory_space<vmem>>, %arg3: memref<1x32xf32, #tpu.memory_space<vmem>>, %arg4: memref<16x32xbf16, #tpu.memory_space<vmem>>, %arg5: memref<16x32xf32, #tpu.memory_space<vmem>>) attributes {dimension_semantics = [#tpu.dimension_semantics<parallel>], iteration_bounds = array<i64: 1>, scalar_prefetch = 0 : i64, scratch_operands = 0 : i64, tpu.core_type = #tpu.core_type<tc>, window_params = [{transform_indices = @transform_0, window_bounds = array<i64: 16, 32>}, {pipeline_mode = #tpu.pipeline_mode<synchronous>, transform_indices = @transform_1, window_bounds = array<i64: 1, 32>}, {pipeline_mode = #tpu.pipeline_mode<synchronous>, transform_indices = @transform_2, window_bounds = array<i64: 1, 32>}, {transform_indices = @transform_3, window_bounds = array<i64: 16, 32>}, {transform_indices = @transform_4, window_bounds = array<i64: 16, 32>}]} {
    %c0 = arith.constant 0 : index
    %c0_0 = arith.constant 0 : index
    %0 = vector.load %arg1[%c0, %c0_0] : memref<16x32xf32, #tpu.memory_space<vmem>>, vector<16x32xf32>
    %c0_1 = arith.constant 0 : index
    %c0_2 = arith.constant 0 : index
    %1 = vector.load %arg5[%c0_1, %c0_2] : memref<16x32xf32, #tpu.memory_space<vmem>>, vector<16x32xf32>
    tpu.vector_store %arg5[%c0_1, %c0_2], %0 {strides = array<i32>} : memref<16x32xf32, #tpu.memory_space<vmem>>, vector<16x32xf32>,
    %cst = arith.constant dense<0.000000e+00> : vector<16xf32>
    %2 = vector.multi_reduction <add>, %0, %cst [1] : vector<16x32xf32> to vector<16xf32>
    %3 = vector.shape_cast %2 : vector<16xf32> to vector<16x1xf32>
    %cst_3 = arith.constant 3.200000e+01 : f32
    %4 = vector.broadcast %cst_3 : f32 to vector<16x1xf32>
    %5 = arith.divf %3, %4 : vector<16x1xf32>
    %6 = vector.broadcast %5 : vector<16x1xf32> to vector<16x32xf32>
    %7 = arith.subf %0, %6 : vector<16x32xf32>
    %8 = arith.mulf %7, %7 : vector<16x32xf32>
    %cst_4 = arith.constant dense<0.000000e+00> : vector<16xf32>
    %9 = vector.multi_reduction <add>, %8, %cst_4 [1] : vector<16x32xf32> to vector<16xf32>
    %10 = vector.shape_cast %9 : vector<16xf32> to vector<16x1xf32>
    %cst_5 = arith.constant 3.200000e+01 : f32
    %11 = vector.broadcast %cst_5 : f32 to vector<16x1xf32>
    %12 = arith.divf %10, %11 : vector<16x1xf32>
    %cst_6 = arith.constant 9.99999974E-6 : f32
    %13 = vector.broadcast %cst_6 : f32 to vector<16x1xf32>
    %14 = arith.addf %12, %13 : vector<16x1xf32>
    %15 = math.rsqrt %14 : vector<16x1xf32>
    %16 = vector.broadcast %15 : vector<16x1xf32> to vector<16x32xf32>
    %17 = arith.mulf %7, %16 : vector<16x32xf32>
    %c0_7 = arith.constant 0 : index
    %c0_8 = arith.constant 0 : index
    %18 = vector.load %arg2[%c0_7, %c0_8] : memref<1x32xf32, #tpu.memory_space<vmem>>, vector<1x32xf32>
    %19 = vector.broadcast %18 : vector<1x32xf32> to vector<16x32xf32>
    %20 = arith.mulf %17, %19 : vector<16x32xf32>
    %c0_9 = arith.constant 0 : index
    %c0_10 = arith.constant 0 : index
    %21 = vector.load %arg3[%c0_9, %c0_10] : memref<1x32xf32, #tpu.memory_space<vmem>>, vector<1x32xf32>
    %22 = vector.broadcast %21 : vector<1x32xf32> to vector<16x32xf32>
    %23 = arith.addf %20, %22 : vector<16x32xf32>
    %24 = arith.truncf %23 : vector<16x32xf32> to vector<16x32xbf16>
    %c0_11 = arith.constant 0 : index
    %c0_12 = arith.constant 0 : index
    %25 = vector.load %arg4[%c0_11, %c0_12] : memref<16x32xbf16, #tpu.memory_space<vmem>>, vector<16x32xbf16>
    tpu.vector_store %arg4[%c0_11, %c0_12], %24 {strides = array<i32>} : memref<16x32xbf16, #tpu.memory_space<vmem>>, vector<16x32xbf16>,
    return
  }
  func.func @transform_0(%arg0: i32) -> (i32, i32) {
    %c0_i32 = arith.constant 0 : i32
    %c0_i32_0 = arith.constant 0 : i32
    return %arg0, %c0_i32 : i32, i32
  }
  func.func @transform_1(%arg0: i32) -> (i32, i32) {
    %c0_i32 = arith.constant 0 : i32
    %c0_i32_0 = arith.constant 0 : i32
    %c0_i32_1 = arith.constant 0 : i32
    return %c0_i32, %c0_i32_0 : i32, i32
  }
  func.func @transform_2(%arg0: i32) -> (i32, i32) {
    %c0_i32 = arith.constant 0 : i32
    %c0_i32_0 = arith.constant 0 : i32
    %c0_i32_1 = arith.constant 0 : i32
    return %c0_i32, %c0_i32_0 : i32, i32
  }
  func.func @transform_3(%arg0: i32) -> (i32, i32) {
    %c0_i32 = arith.constant 0 : i32
    %c0_i32_0 = arith.constant 0 : i32
    return %arg0, %c0_i32 : i32, i32
  }
  func.func @transform_4(%arg0: i32) -> (i32, i32) {
    %c0_i32 = arith.constant 0 : i32
    %c0_i32_0 = arith.constant 0 : i32
    return %arg0, %c0_i32 : i32, i32
  }
}

</mosaic_0001>

<llo_original>
// kernel: tpu_custom_call.1
$region0: #{tpu_custom_call.1}
  #allocation0 [shape = 'u32[]', space=smem, size = 0x4, offset = 0x4, fixed_abs, tag = 'smem constant byte address 0x4 - core index']
  #allocation1 [shape = 'u32[144,128]{1,0:T(1,128)}', space=vmem, size = 0x12000, scoped, tag = 'internal scratch']
  %s0 = inlined_call_operand.hbm [shape: f32[16,32], index: 0, kind: input, shape index: {}]
  %s1 = inlined_call_operand.vmem [shape: f32[1,32], index: 1, kind: input, shape index: {}]
  %s2 = inlined_call_operand.vmem [shape: f32[1,32], index: 2, kind: input, shape index: {}]
  %s3 = inlined_call_operand.hbm [shape: bf16[16,32], index: 3, kind: output, shape index: {0}]
  %s4 = inlined_call_operand.hbm [shape: f32[16,32], index: 4, kind: output, shape index: {1}]
  %5 = xla_tuple %s3, %s4
  %s6 = sld [smem:[#allocation0]]
  $region34: #{tpu_custom_call.1} parent=0
    _
  %s8 = ssub.s32 1, %s6
  %s9 = scalar_select 0, %s8, %s6
  $region1: #{tpu_custom_call.1} parent=0
    #allocation2 [shape = 'u8[8192]{0}', space=vmem, size = 0x2000, scoped, tag = 'input window, operand 0, single buffered']
    #allocation3 [shape = 's32[1]{0}', space=sflag, size = 0x4, scoped, tag = 'scoped memory for tpu_custom_call.1']
    #allocation4 [shape = 's32[1]{0}', space=sflag, size = 0x4, scoped, tag = 'scoped memory for tpu_custom_call.1']
    #allocation5 [shape = 'u8[4096]{0}', space=vmem, size = 0x1000, scoped, tag = 'output window, operand 0, single buffered']
    #allocation6 [shape = 'u8[8192]{0}', space=vmem, size = 0x2000, scoped, tag = 'output window, operand 1, single buffered']
    #allocation7 [shape = 's32[1]{0}', space=sflag, size = 0x4, scoped, tag = 'scoped memory for tpu_custom_call.1']
    %10 = vsyncpa [#allocation3], 0
    %11 = vsyncpa [#allocation4], 0
    %12 = vsyncpa [#allocation7], 0
    // Predicated region
    $region2: #{tpu_custom_call.1} parent=1 // pred_check
      _
    $region3: #{tpu_custom_call.1} parent=1 // pred_check_branch
      %14 = sbr.rel (0) target = $region5
    $region4: #{tpu_custom_call.1} parent=1 // pred_region
      %s16 = ssub.s32 256, 256
      %17 = vsyncadd [#allocation3], %s16
      %s18 = sshll.u32 [#allocation2], 4
      %s19 = int_to_ptr.vmem [resolvable:$true] %s18
      %24 = dma.hbm_to_vmem [thread:$0]  %s0, 256, %s19, [#allocation3], 128, 128, 8
    $region5: #{tpu_custom_call.1} parent=1 // pred_fallthru
      _
    // Predicated region
    $region6: #{tpu_custom_call.1} parent=1 // pred_check
      _
    $region7: #{tpu_custom_call.1} parent=1 // pred_check_branch
      %26 = sbr.rel (0) target = $region9
    $region8: #{tpu_custom_call.1} parent=1 // pred_region
      _
    $region9: #{tpu_custom_call.1} parent=1 // pred_fallthru
      _
    // Predicated region
    $region10: #{tpu_custom_call.1} parent=1 // pred_check
      _
    $region11: #{tpu_custom_call.1} parent=1 // pred_check_branch
      %28 = sbr.rel (0) target = $region13
    $region12: #{tpu_custom_call.1} parent=1 // pred_region
      _
    $region13: #{tpu_custom_call.1} parent=1 // pred_fallthru
      _
    // Predicated region
    $region14: #{tpu_custom_call.1} parent=1 // pred_check
      _
    $region15: #{tpu_custom_call.1} parent=1 // pred_check_branch
      %30 = sbr.rel (0) target = $region17
    $region16: #{tpu_custom_call.1} parent=1 // pred_region
      %31 = dma.done [#allocation3], 256
    $region17: #{tpu_custom_call.1} parent=1 // pred_fallthru
      _
    %v32 = vld [vmem:[#allocation2] sm:$0xff]
    %v33 = vld [vmem:[#allocation2 + $0x8] sm:$0xff]
    %vm34 = vcmask 261120
    %35 = vst.msk [vmem:[#allocation6] sm:$0xff] %vm34, %v32
    %36 = vst.msk [vmem:[#allocation6 + $0x8] sm:$0xff] %vm34, %v33
    %v37 = vsel %vm34, %v32, 0.0
    %38 = vadd.xlane.f32.xlu0 %v37
    %v39 = vpop.xlane.xlu0 %38
    %v40 = vsel %vm34, %v33, 0.0
    %41 = vadd.xlane.f32.xlu0 %v40
    %v42 = vpop.xlane.xlu0 %41
    %v43 = vrcp.pop 32.0
    %v44 = vmul.f32 %v39, %v43
    %v45 = vmul.f32 %v42, %v43
    %v46 = vsub.f32 %v32, %v44
    %v47 = vsub.f32 %v33, %v45
    %v48 = vmul.f32 %v46, %v46
    %v49 = vmul.f32 %v47, %v47
    %v50 = vsel %vm34, %v48, 0.0
    %51 = vadd.xlane.f32.xlu0 %v50
    %v52 = vpop.xlane.xlu0 %51
    %v53 = vsel %vm34, %v49, 0.0
    %54 = vadd.xlane.f32.xlu0 %v53
    %v55 = vpop.xlane.xlu0 %54
    %v56 = vmul.f32 %v52, %v43
    %v57 = vmul.f32 %v55, %v43
    %v58 = vadd.f32 %v56, 1e-05
    %v59 = vadd.f32 %v57, 1e-05
    %v60 = vrsqrt.pop %v58
    %v61 = vrsqrt.pop %v59
    %v62 = vmul.f32 %v46, %v60
    %v63 = vmul.f32 %v47, %v61
    %v64 = vld [vmem:[%s1] sm:$0x1]
    %v66 = vlaneseq
    %v67 = vshrl.u32 %v66, 7
    %v68 = vsub.s32 0, %v67
    %v69 = vrot.slane %v64, %v68
    %v71 = vmul.f32 %v62, %v69
    %v72 = vmul.f32 %v63, %v69
    %v73 = vld [vmem:[%s2] sm:$0x1]
    %v75 = vlaneseq
    %v76 = vshrl.u32 %v75, 7
    %v77 = vsub.s32 0, %v76
    %v78 = vrot.slane %v73, %v77
    %v80 = vadd.f32 %v71, %v78
    %v81 = vadd.f32 %v72, %v78
    %v82 = vpack.c.bf16 %v81, %v80
    %v84 = vunpack.c.l.b16 %v82
    %v85 = vunpack.c.h.b16 %v82
    %v86 = vpack.c.b16 %v84, %v84
    %v87 = vpack.c.b16 %v85, %v85
    %vm90 = vcmask 257024
    %91 = vst.msk [vmem:[#allocation5] sm:$0xf] %vm90, %v86
    %92 = vst.msk [vmem:[#allocation5 + $0x4] sm:$0xf] %vm90, %v87
    // Predicated region
    $region18: #{tpu_custom_call.1} parent=1 // pred_check
      _
    $region19: #{tpu_custom_call.1} parent=1 // pred_check_branch
      %94 = sbr.rel (0) target = $region21
    $region20: #{tpu_custom_call.1} parent=1 // pred_region
      %s96 = ssub.s32 128, 128
      %97 = vsyncadd [#allocation4], %s96
      %s98 = sshll.u32 [#allocation5], 4
      %s99 = int_to_ptr.vmem [resolvable:$true] %s98
      %104 = dma.vmem_to_hbm [thread:$0]  %s99, 128, %s3, [#allocation4], 64, 64, 4
    $region21: #{tpu_custom_call.1} parent=1 // pred_fallthru
      _
    // Predicated region
    $region22: #{tpu_custom_call.1} parent=1 // pred_check
      _
    $region23: #{tpu_custom_call.1} parent=1 // pred_check_branch
      %106 = sbr.rel (0) target = $region25
    $region24: #{tpu_custom_call.1} parent=1 // pred_region
      %s108 = ssub.s32 256, 256
      %109 = vsyncadd [#allocation7], %s108
      %s110 = sshll.u32 [#allocation6], 4
      %s111 = int_to_ptr.vmem [resolvable:$true] %s110
      %116 = dma.vmem_to_hbm [thread:$0]  %s111, 256, %s4, [#allocation7], 128, 128, 8
    $region25: #{tpu_custom_call.1} parent=1 // pred_fallthru
      _
    // Predicated region
    $region26: #{tpu_custom_call.1} parent=1 // pred_check
      _
    $region27: #{tpu_custom_call.1} parent=1 // pred_check_branch
      %118 = sbr.rel (0) target = $region29
    $region28: #{tpu_custom_call.1} parent=1 // pred_region
      %119 = dma.done [#allocation4], 128
    $region29: #{tpu_custom_call.1} parent=1 // pred_fallthru
      _
    // Predicated region
    $region30: #{tpu_custom_call.1} parent=1 // pred_check
      _
    $region31: #{tpu_custom_call.1} parent=1 // pred_check_branch
      %121 = sbr.rel (0) target = $region33
    $region32: #{tpu_custom_call.1} parent=1 // pred_region
      %122 = dma.done [#allocation7], 256
    $region33: #{tpu_custom_call.1} parent=1 // pred_fallthru
      _
    %123 = vsyncpa [#allocation3], 1
    %124 = vsyncpa [#allocation4], 1
    %125 = vsyncpa [#allocation7], 1

</llo_original>
